<compile_context>
chip_gen: v7x
topology: tpu7x:2x2x1
jax: 0.10.0
libtpu: 0.0.40
codegen_flags: <defaults>
</compile_context>

<pallas_src>
import functools

import jax
import jax.numpy as jnp
from jax import lax
from jax.experimental import pallas as pl
from jax.experimental.pallas import tpu as pltpu


# -----------------------------------------------------------------------------
# Kernel 1: projection + L2-normalization (the translatable tail of forward()).
# -----------------------------------------------------------------------------
def embed_head_kernel(x_ref, w_ref, b_ref, o_ref):
    # x: (NM, F), w: (F, D) (pre-transposed torch Linear weight), b: (1, D)
    y = jnp.dot(x_ref[...], w_ref[...],
                preferred_element_type=jnp.float32) + b_ref[...]       # (NM, D)
    n2 = jnp.sum(y * y, axis=1, keepdims=True)                          # (NM, 1)
    o_ref[...] = y * lax.rsqrt(jnp.maximum(n2, jnp.float32(1e-30)))


def speech_embedder_head(feats, proj_w, proj_b):
    """feats: (NM, F); proj_w: (D, F) torch-layout Linear weight; proj_b: (D,)."""
    NM, F = feats.shape
    D = proj_w.shape[0]
    return pl.pallas_call(
        embed_head_kernel,
        out_shape=jax.ShapeDtypeStruct((NM, D), jnp.float32),
        in_specs=[
            pl.BlockSpec(memory_space=pltpu.MemorySpace.VMEM),   # features
            pl.BlockSpec(memory_space=pltpu.MemorySpace.VMEM),   # weight^T
            pl.BlockSpec(memory_space=pltpu.MemorySpace.VMEM),   # bias
        ],
        out_specs=pl.BlockSpec(memory_space=pltpu.MemorySpace.VMEM),
    )(feats.astype(jnp.float32),
      proj_w.T.astype(jnp.float32),
      proj_b.reshape(1, D).astype(jnp.float32))


# -----------------------------------------------------------------------------
# Kernel 2: GE2E loss, lane-dense (N_speakers, N*M) working layout.
# -----------------------------------------------------------------------------
def ge2e_kernel(e_ref, w_ref, b_ref, loss_ref, s_ref, *, n_spk, m_utt):
    NM = n_spk * m_utt
    D = e_ref.shape[1]
    eps = jnp.float32(1e-8)            # torch cosine_similarity eps
    w = w_ref[0, 0]
    b = b_ref[0, 0]
    e = e_ref[...]                     # (NM, D) f32

    # --- per-speaker embedding sums via sublane reduces (no HBM one-hot, no
    #     segment-sum matmul) --------------------------------------------------
    for j in range(n_spk):
        blk = e_ref[pl.ds(j * m_utt, m_utt), :]                      # (M, D)
        s_ref[pl.ds(j, 1), :] = jnp.sum(blk, axis=0, keepdims=True)
    S = s_ref[...]                                                   # (N, D)

    # ||S_j||^2 directly (gram matmul removed).
    S_norm2 = jnp.sum(S * S, axis=1, keepdims=True)                  # (N, 1)

    # ||e_r||^2 as a lane-dense (1, NM) row.  A tiny ones-row matvec keeps the
    # result on the lane axis (avoids an (NM,1)->(1,NM) relayout); the MXU is
    # otherwise idle here.
    esq = e * e
    ones_row = jnp.ones((1, D), jnp.float32)
    e_norm2 = lax.dot_general(ones_row, esq, (((1,), (1,)), ((), ())),
                              preferred_element_type=jnp.float32)    # (1, NM)

    # The one real MXU matmul: every speaker sum against every utterance.
    DS = lax.dot_general(S, e, (((1,), (1,)), ((), ())),
                         preferred_element_type=jnp.float32)         # (N, NM)

    j_ids = lax.broadcasted_iota(jnp.int32, (n_spk, NM), 0)
    r_ids = lax.broadcasted_iota(jnp.int32, (n_spk, NM), 1)
    diag_mask = (r_ids // m_utt) == j_ids                            # (N, NM)

    Mf = jnp.float32(m_utt)
    inv_Mm1 = jnp.float32(1.0 / (m_utt - 1))

    # off-diagonal: cos(e_r, S_j / M) with the 1/M folded into the per-speaker
    # reciprocal factor; rsqrt instead of sqrt-then-divide.
    inv_e = lax.rsqrt(jnp.maximum(e_norm2, eps * eps))               # (1, NM)
    inv_c = lax.rsqrt(jnp.maximum(S_norm2, (Mf * eps) * (Mf * eps)))  # (N, 1)
    cos_off = DS * inv_e * inv_c                                     # (N, NM)

    # diagonal: cosine vs leave-one-out centroid, all as (1, NM) rows.
    d_own = jnp.sum(jnp.where(diag_mask, DS, 0.0),
                    axis=0, keepdims=True)                           # (1, NM)
    Sn_own = jnp.sum(jnp.where(diag_mask, S_norm2, 0.0),
                     axis=0, keepdims=True)                          # (1, NM)
    excl_dot = (d_own - e_norm2) * inv_Mm1
    excl_norm2 = (Sn_own - 2.0 * d_own + e_norm2) * (inv_Mm1 * inv_Mm1)
    inv_excl = lax.rsqrt(jnp.maximum(excl_norm2, eps * eps))
    cos_diag = excl_dot * inv_e * inv_excl                           # (1, NM)

    # Apply (+1e-6, w, b) affine once; reuse the diagonal row directly as `pos`.
    bias = w * jnp.float32(1e-6) + b
    sim = w * jnp.where(diag_mask, cos_diag, cos_off) + bias         # (N, NM)
    pos = w * cos_diag + bias                                        # (1, NM)
    # logsumexp over the (sublane) speaker axis — NM stays on lanes for exp.
    neg = jnp.log(jnp.sum(jnp.exp(sim), axis=0, keepdims=True) + jnp.float32(1e-6))
    loss_ref[0, 0] = jnp.sum(neg - pos)


def ge2e_loss(embeddings, w=10.0, b=-5.0):
    """embeddings: (N, M, D) float array. Returns scalar GE2E loss."""
    N, M, D = embeddings.shape
    if M < 2:
        raise ValueError("GE2E loss requires at least 2 utterances per speaker.")
    e_flat = embeddings.reshape(N * M, D).astype(jnp.float32)
    w_arr = jnp.asarray(w, jnp.float32).reshape(1, 1)
    b_arr = jnp.asarray(b, jnp.float32).reshape(1, 1)

    kernel = functools.partial(ge2e_kernel, n_spk=N, m_utt=M)
    # NOTE: single untiled block is fine at these sizes.  For large N*M*D, tile
    # rows over a grid (accumulate in scratch, finalize with pl.when) and set
    # vmem_limit_bytes; for many independent groups on v7x, add a leading
    # "parallel" grid axis to use both TensorCores.
    loss = pl.pallas_call(
        kernel,
        out_shape=jax.ShapeDtypeStruct((1, 1), jnp.float32),
        in_specs=[
            pl.BlockSpec(memory_space=pltpu.MemorySpace.VMEM),   # e_flat
            pl.BlockSpec(memory_space=pltpu.MemorySpace.SMEM),   # w
            pl.BlockSpec(memory_space=pltpu.MemorySpace.SMEM),   # b
        ],
        out_specs=pl.BlockSpec(memory_space=pltpu.MemorySpace.SMEM),
        scratch_shapes=[pltpu.VMEM((N, D), jnp.float32)],        # speaker sums
    )(e_flat, w_arr, b_arr)
    return loss[0, 0]


# -----------------------------------------------------------------------------
# Pure-JAX references.
# -----------------------------------------------------------------------------
def embed_head_ref(feats, proj_w, proj_b):
    y = feats.astype(jnp.float32) @ proj_w.T.astype(jnp.float32) + proj_b
    return y / jnp.linalg.norm(y, axis=1, keepdims=True)


def ge2e_loss_ref(e, w=10.0, b=-5.0):
    """Pure-JAX reference mirroring the PyTorch GE2E helpers."""
    N, M, D = e.shape
    e = e.astype(jnp.float32)
    eps = 1e-8
    centroids = e.mean(axis=1)                                     # (N, D)
    sum_e = e.sum(axis=1)                                          # (N, D)
    e_norm = jnp.linalg.norm(e, axis=2)                            # (N, M)
    c_norm = jnp.linalg.norm(centroids, axis=1)                    # (N,)
    dots = jnp.einsum('nmd,kd->nmk', e, centroids)                 # (N, M, N)
    cos_off = dots / (jnp.maximum(e_norm, eps)[..., None]
                      * jnp.maximum(c_norm, eps)[None, None, :])
    excl = (sum_e[:, None, :] - e) / (M - 1)                       # (N, M, D)
    excl_norm = jnp.linalg.norm(excl, axis=2)                      # (N, M)
    dot_excl = jnp.sum(e * excl, axis=2)                           # (N, M)
    cos_diag = dot_excl / (jnp.maximum(e_norm, eps)
                           * jnp.maximum(excl_norm, eps))
    eye = jnp.eye(N, dtype=bool)[:, None, :]                       # (N, 1, N)
    cossim = jnp.where(eye, cos_diag[:, :, None], cos_off) + 1e-6
    sim = w * cossim + b
    pos = jnp.sum(jnp.where(eye, sim, 0.0), axis=2)                # (N, M)
    neg = jnp.log(jnp.sum(jnp.exp(sim), axis=2) + 1e-6)
    return jnp.sum(neg - pos)


if __name__ == "__main__":
    key = jax.random.PRNGKey(0)
    N, M = 4, 6                        # speakers, utterances per speaker
    F, D = 768, 256                    # LSTM feature dim, embedding dim

    k1, k2 = jax.random.split(key, 2)
    # Stand-in for the frozen wav2vec2 + LSTM last-timestep features.
    feats = 0.1 * jax.random.normal(k1, (N * M, F), dtype=jnp.float32)
    # Deterministic projection parameters (Linear(768, 256), bias init 0).
    proj_w = jax.random.normal(k2, (D, F), dtype=jnp.float32) / jnp.sqrt(F)
    proj_b = jnp.zeros((D,), jnp.float32)

    # Forward tail: projection + L2 normalize (Pallas) vs reference.
    emb = jax.block_until_ready(speech_embedder_head(feats, proj_w, proj_b))
    emb_ref = embed_head_ref(feats, proj_w, proj_b)
    assert jnp.all(jnp.isfinite(emb))
    assert jnp.allclose(emb, emb_ref, rtol=1e-4, atol=1e-4)

    # GE2E loss on the (N, M, D) embeddings (Pallas) vs reference.
    w, b = 10.0, -5.0                  # GE2ELoss params; clamp(w, 1e-6) is a no-op
    loss = jax.block_until_ready(ge2e_loss(emb.reshape(N, M, D), w, b))
    ref = ge2e_loss_ref(emb_ref.reshape(N, M, D), w, b)
    assert jnp.isfinite(loss), "kernel produced non-finite loss"
    assert jnp.allclose(loss, ref, rtol=1e-4, atol=1e-3), (loss, ref)

    print("KERNEL_OK")
</pallas_src>

<mosaic_0001>
module attributes {stable_mosaic.version = 11 : i64} {
  func.func @embed_head_kernel(%arg0: memref<24x768xf32, #tpu.memory_space<vmem>>, %arg1: memref<768x256xf32, #tpu.memory_space<vmem>>, %arg2: memref<1x256xf32, #tpu.memory_space<vmem>>, %arg3: memref<24x256xf32, #tpu.memory_space<vmem>>) attributes {dimension_semantics = [], scalar_prefetch = 0 : i64, scratch_operands = 0 : i64, tpu.core_type = #tpu.core_type<tc>} {
    %c0 = arith.constant 0 : index
    %c0_0 = arith.constant 0 : index
    %0 = vector.load %arg0[%c0, %c0_0] : memref<24x768xf32, #tpu.memory_space<vmem>>, vector<24x768xf32>
    %c0_1 = arith.constant 0 : index
    %c0_2 = arith.constant 0 : index
    %1 = vector.load %arg1[%c0_1, %c0_2] : memref<768x256xf32, #tpu.memory_space<vmem>>, vector<768x256xf32>
    %cst = arith.constant dense<0.000000e+00> : vector<24x256xf32>
    %2 = tpu.matmul %0, %1, %cst {dimension_numbers = #tpu.dot_dimension_numbers<[1], [0], [0], [1], [0, 0, 1, 1], [], []>} : vector<24x768xf32>, vector<768x256xf32>, vector<24x256xf32> -> vector<24x256xf32>
    %c0_3 = arith.constant 0 : index
    %c0_4 = arith.constant 0 : index
    %3 = vector.load %arg2[%c0_3, %c0_4] : memref<1x256xf32, #tpu.memory_space<vmem>>, vector<1x256xf32>
    %4 = vector.broadcast %3 : vector<1x256xf32> to vector<24x256xf32>
    %5 = arith.addf %2, %4 : vector<24x256xf32>
    %6 = arith.mulf %5, %5 : vector<24x256xf32>
    %cst_5 = arith.constant dense<0.000000e+00> : vector<24xf32>
    %7 = vector.multi_reduction <add>, %6, %cst_5 [1] : vector<24x256xf32> to vector<24xf32>
    %8 = vector.shape_cast %7 : vector<24xf32> to vector<24x1xf32>
    %cst_6 = arith.constant 1.000000e-30 : f32
    %9 = vector.broadcast %cst_6 : f32 to vector<24x1xf32>
    %10 = arith.maximumf %8, %9 : vector<24x1xf32>
    %11 = math.rsqrt %10 : vector<24x1xf32>
    %12 = vector.broadcast %11 : vector<24x1xf32> to vector<24x256xf32>
    %13 = arith.mulf %5, %12 : vector<24x256xf32>
    %c0_7 = arith.constant 0 : index
    %c0_8 = arith.constant 0 : index
    %14 = vector.load %arg3[%c0_7, %c0_8] : memref<24x256xf32, #tpu.memory_space<vmem>>, vector<24x256xf32>
    tpu.vector_store %arg3[%c0_7, %c0_8], %13 {strides = array<i32>} : memref<24x256xf32, #tpu.memory_space<vmem>>, vector<24x256xf32>,
    return
  }
}

</mosaic_0001>

<llo_original>
// kernel: tpu_custom_call.1
$region0: #{tpu_custom_call.1}
  #allocation0 [shape = 'u32[]', space=smem, size = 0x4, offset = 0x4, fixed_abs, tag = 'smem constant byte address 0x4 - core index']
  #allocation1 [shape = 'u32[144,128]{1,0:T(1,128)}', space=vmem, size = 0x12000, scoped, tag = 'internal scratch']
  %s0 = inlined_call_operand.hbm [shape: f32[24,768], index: 0, kind: input, shape index: {}]
  %s1 = inlined_call_operand.hbm [shape: f32[768,256], index: 1, kind: input, shape index: {}]
  %s2 = inlined_call_operand.vmem [shape: f32[1,256], index: 2, kind: input, shape index: {}]
  %s3 = inlined_call_operand.hbm [shape: f32[24,256], index: 3, kind: output, shape index: {}]
  %s4 = sld [smem:[#allocation0]]
  $region30: #{tpu_custom_call.1} parent=0
    _
  %s6 = ssub.s32 1, %s4
  %s7 = scalar_select 0, %s6, %s4
  $region1: #{tpu_custom_call.1} parent=0
    #allocation2 [shape = 'u8[73728]{0}', space=vmem, size = 0x12000, scoped, tag = 'input window, operand 0, single buffered']
    #allocation3 [shape = 's32[1]{0}', space=sflag, size = 0x4, scoped, tag = 'scoped memory for tpu_custom_call.1']
    #allocation4 [shape = 's32[1]{0}', space=sflag, size = 0x4, scoped, tag = 'scoped memory for tpu_custom_call.1']
    #allocation5 [shape = 'u8[786432]{0}', space=vmem, size = 0xc0000, scoped, tag = 'input window, operand 1, single buffered']
    #allocation6 [shape = 's32[1]{0}', space=sflag, size = 0x4, scoped, tag = 'scoped memory for tpu_custom_call.1']
    #allocation7 [shape = 'u8[24576]{0}', space=vmem, size = 0x6000, scoped, tag = 'output window, operand 0, single buffered']
    %8 = vsyncpa [#allocation3], 0
    %9 = vsyncpa [#allocation6], 0
    %10 = vsyncpa [#allocation4], 0
    // Predicated region
    $region2: #{tpu_custom_call.1} parent=1 // pred_check
      _
    $region3: #{tpu_custom_call.1} parent=1 // pred_check_branch
      %12 = sbr.rel (0) target = $region5
    $region4: #{tpu_custom_call.1} parent=1 // pred_region
      %s14 = ssub.s32 2304, 2304
      %15 = vsyncadd [#allocation3], %s14
      %s16 = sshll.u32 [#allocation2], 4
      %s17 = int_to_ptr.vmem [resolvable:$true] %s16
      %22 = dma.hbm_to_vmem [thread:$0]  %s0, 2304, %s17, [#allocation3], 768, 768, 48
    $region5: #{tpu_custom_call.1} parent=1 // pred_fallthru
      _
    // Predicated region
    $region6: #{tpu_custom_call.1} parent=1 // pred_check
      _
    $region7: #{tpu_custom_call.1} parent=1 // pred_check_branch
      %24 = sbr.rel (0) target = $region9
    $region8: #{tpu_custom_call.1} parent=1 // pred_region
      %s26 = ssub.s32 24576, 24576
      %27 = vsyncadd [#allocation6], %s26
      %s28 = sshll.u32 [#allocation5], 4
      %s29 = int_to_ptr.vmem [resolvable:$true] %s28
      %34 = dma.hbm_to_vmem [thread:$0]  %s1, 24576, %s29, [#allocation6], 256, 256, 16
    $region9: #{tpu_custom_call.1} parent=1 // pred_fallthru
      _
    // Predicated region
    $region10: #{tpu_custom_call.1} parent=1 // pred_check
      _
    $region11: #{tpu_custom_call.1} parent=1 // pred_check_branch
      %36 = sbr.rel (0) target = $region13
    $region12: #{tpu_custom_call.1} parent=1 // pred_region
      _
    $region13: #{tpu_custom_call.1} parent=1 // pred_fallthru
      _
    // Predicated region
    $region14: #{tpu_custom_call.1} parent=1 // pred_check
      _
    $region15: #{tpu_custom_call.1} parent=1 // pred_check_branch
      %38 = sbr.rel (0) target = $region17
    $region16: #{tpu_custom_call.1} parent=1 // pred_region
      %39 = dma.done [#allocation3], 2304
    $region17: #{tpu_custom_call.1} parent=1 // pred_fallthru
      _
    // Predicated region
    $region18: #{tpu_custom_call.1} parent=1 // pred_check
      _
    $region19: #{tpu_custom_call.1} parent=1 // pred_check_branch
      %41 = sbr.rel (0) target = $region21
    $region20: #{tpu_custom_call.1} parent=1 // pred_region
      %42 = dma.done [#allocation6], 24576
    $region21: #{tpu_custom_call.1} parent=1 // pred_fallthru
      _
    %v43 = vld [vmem:[#allocation2] sm:$0xff]
    %v44 = vld [vmem:[#allocation2 + $0x8] sm:$0xff]
    %v45 = vld [vmem:[#allocation2 + $0x10] sm:$0xff]
    %v46 = vld [vmem:[#allocation2 + $0x18] sm:$0xff]
    %v47 = vld [vmem:[#allocation2 + $0x20] sm:$0xff]
    %v48 = vld [vmem:[#allocation2 + $0x28] sm:$0xff]
    %v49 = vld [vmem:[#allocation2 + $0x30] sm:$0xff]
    %v50 = vld [vmem:[#allocation2 + $0x38] sm:$0xff]
    %v51 = vld [vmem:[#allocation2 + $0x40] sm:$0xff]
    %v52 = vld [vmem:[#allocation2 + $0x48] sm:$0xff]
    %v53 = vld [vmem:[#allocation2 + $0x50] sm:$0xff]
    %v54 = vld [vmem:[#allocation2 + $0x58] sm:$0xff]
    %v55 = vld [vmem:[#allocation2 + $0x60] sm:$0xff]
    %v56 = vld [vmem:[#allocation2 + $0x68] sm:$0xff]
    %v57 = vld [vmem:[#allocation2 + $0x70] sm:$0xff]
    %v58 = vld [vmem:[#allocation2 + $0x78] sm:$0xff]
    %v59 = vld [vmem:[#allocation2 + $0x80] sm:$0xff]
    %v60 = vld [vmem:[#allocation2 + $0x88] sm:$0xff]
    %v61 = vld [vmem:[#allocation5] sm:$0xff]
    %v62 = vld [vmem:[#allocation5 + $0x8] sm:$0xff]
    %v63 = vld [vmem:[#allocation5 + $0x10] sm:$0xff]
    %v64 = vld [vmem:[#allocation5 + $0x18] sm:$0xff]
    %v65 = vld [vmem:[#allocation5 + $0x20] sm:$0xff]
    %v66 = vld [vmem:[#allocation5 + $0x28] sm:$0xff]
    %v67 = vld [vmem:[#allocation5 + $0x30] sm:$0xff]
    %v68 = vld [vmem:[#allocation5 + $0x38] sm:$0xff]
    %v69 = vld [vmem:[#allocation5 + $0x40] sm:$0xff]
    %v70 = vld [vmem:[#allocation5 + $0x48] sm:$0xff]
    %v71 = vld [vmem:[#allocation5 + $0x50] sm:$0xff]
    %v72 = vld [vmem:[#allocation5 + $0x58] sm:$0xff]
    %v73 = vld [vmem:[#allocation5 + $0x60] sm:$0xff]
    %v74 = vld [vmem:[#allocation5 + $0x68] sm:$0xff]
    %v75 = vld [vmem:[#allocation5 + $0x70] sm:$0xff]
    %v76 = vld [vmem:[#allocation5 + $0x78] sm:$0xff]
    %v77 = vld [vmem:[#allocation5 + $0x80] sm:$0xff]
    %v78 = vld [vmem:[#allocation5 + $0x88] sm:$0xff]
    %v79 = vld [vmem:[#allocation5 + $0x90] sm:$0xff]
    %v80 = vld [vmem:[#allocation5 + $0x98] sm:$0xff]
    %v81 = vld [vmem:[#allocation5 + $0xa0] sm:$0xff]
    %v82 = vld [vmem:[#allocation5 + $0xa8] sm:$0xff]
    %v83 = vld [vmem:[#allocation5 + $0xb0] sm:$0xff]
    %v84 = vld [vmem:[#allocation5 + $0xb8] sm:$0xff]
    %v85 = vld [vmem:[#allocation5 + $0xc0] sm:$0xff]
    %v86 = vld [vmem:[#allocation5 + $0xc8] sm:$0xff]
    %v87 = vld [vmem:[#allocation5 + $0xd0] sm:$0xff]
    %v88 = vld [vmem:[#allocation5 + $0xd8] sm:$0xff]
    %v89 = vld [vmem:[#allocation5 + $0xe0] sm:$0xff]
    %v90 = vld [vmem:[#allocation5 + $0xe8] sm:$0xff]
    %v91 = vld [vmem:[#allocation5 + $0xf0] sm:$0xff]
    %v92 = vld [vmem:[#allocation5 + $0xf8] sm:$0xff]
    %v93 = vld [vmem:[#allocation5 + $0x100] sm:$0xff]
    %v94 = vld [vmem:[#allocation5 + $0x108] sm:$0xff]
    %v95 = vld [vmem:[#allocation5 + $0x110] sm:$0xff]
    %v96 = vld [vmem:[#allocation5 + $0x118] sm:$0xff]
    %v97 = vld [vmem:[#allocation5 + $0x120] sm:$0xff]
    %v98 = vld [vmem:[#allocation5 + $0x128] sm:$0xff]
    %v99 = vld [vmem:[#allocation5 + $0x130] sm:$0xff]
    %v100 = vld [vmem:[#allocation5 + $0x138] sm:$0xff]
    %v101 = vld [vmem:[#allocation5 + $0x140] sm:$0xff]
    %v102 = vld [vmem:[#allocation5 + $0x148] sm:$0xff]
    %v103 = vld [vmem:[#allocation5 + $0x150] sm:$0xff]
    %v104 = vld [vmem:[#allocation5 + $0x158] sm:$0xff]
    %v105 = vld [vmem:[#allocation5 + $0x160] sm:$0xff]
    %v106 = vld [vmem:[#allocation5 + $0x168] sm:$0xff]
    %v107 = vld [vmem:[#allocation5 + $0x170] sm:$0xff]
    %v108 = vld [vmem:[#allocation5 + $0x178] sm:$0xff]
    %v109 = vld [vmem:[#allocation5 + $0x180] sm:$0xff]
    %v110 = vld [vmem:[#allocation5 + $0x188] sm:$0xff]
    %v111 = vld [vmem:[#allocation5 + $0x190] sm:$0xff]
    %v112 = vld [vmem:[#allocation5 + $0x198] sm:$0xff]
    %v113 = vld [vmem:[#allocation5 + $0x1a0] sm:$0xff]
    %v114 = vld [vmem:[#allocation5 + $0x1a8] sm:$0xff]
    %v115 = vld [vmem:[#allocation5 + $0x1b0] sm:$0xff]
    %v116 = vld [vmem:[#allocation5 + $0x1b8] sm:$0xff]
    %v117 = vld [vmem:[#allocation5 + $0x1c0] sm:$0xff]
    %v118 = vld [vmem:[#allocation5 + $0x1c8] sm:$0xff]
    %v119 = vld [vmem:[#allocation5 + $0x1d0] sm:$0xff]
    %v120 = vld [vmem:[#allocation5 + $0x1d8] sm:$0xff]
    %v121 = vld [vmem:[#allocation5 + $0x1e0] sm:$0xff]
    %v122 = vld [vmem:[#allocation5 + $0x1e8] sm:$0xff]
    %v123 = vld [vmem:[#allocation5 + $0x1f0] sm:$0xff]
    %v124 = vld [vmem:[#allocation5 + $0x1f8] sm:$0xff]
    %v125 = vld [vmem:[#allocation5 + $0x200] sm:$0xff]
    %v126 = vld [vmem:[#allocation5 + $0x208] sm:$0xff]
    %v127 = vld [vmem:[#allocation5 + $0x210] sm:$0xff]
    %v128 = vld [vmem:[#allocation5 + $0x218] sm:$0xff]
    %v129 = vld [vmem:[#allocation5 + $0x220] sm:$0xff]
    %v130 = vld [vmem:[#allocation5 + $0x228] sm:$0xff]
    %v131 = vld [vmem:[#allocation5 + $0x230] sm:$0xff]
    %v132 = vld [vmem:[#allocation5 + $0x238] sm:$0xff]
    %v133 = vld [vmem:[#allocation5 + $0x240] sm:$0xff]
    %v134 = vld [vmem:[#allocation5 + $0x248] sm:$0xff]
    %v135 = vld [vmem:[#allocation5 + $0x250] sm:$0xff]
    %v136 = vld [vmem:[#allocation5 + $0x258] sm:$0xff]
    %v137 = vld [vmem:[#allocation5 + $0x260] sm:$0xff]
    %v138 = vld [vmem:[#allocation5 + $0x268] sm:$0xff]
    %v139 = vld [vmem:[#allocation5 + $0x270] sm:$0xff]
    %v140 = vld [vmem:[#allocation5 + $0x278] sm:$0xff]
    %v141 = vld [vmem:[#allocation5 + $0x280] sm:$0xff]
    %v142 = vld [vmem:[#allocation5 + $0x288] sm:$0xff]
    %v143 = vld [vmem:[#allocation5 + $0x290] sm:$0xff]
    %v144 = vld [vmem:[#allocation5 + $0x298] sm:$0xff]
    %v145 = vld [vmem:[#allocation5 + $0x2a0] sm:$0xff]
    %v146 = vld [vmem:[#allocation5 + $0x2a8] sm:$0xff]
    %v147 = vld [vmem:[#allocation5 + $0x2b0] sm:$0xff]
    %v148 = vld [vmem:[#allocation5 + $0x2b8] sm:$0xff]
    %v149 = vld [vmem:[#allocation5 + $0x2c0] sm:$0xff]
    %v150 = vld [vmem:[#allocation5 + $0x2c8] sm:$0xff]
    %v151 = vld [vmem:[#allocation5 + $0x2d0] sm:$0xff]
    %v152 = vld [vmem:[#allocation5 + $0x2d8] sm:$0xff]
    %v153 = vld [vmem:[#allocation5 + $0x2e0] sm:$0xff]
    %v154 = vld [vmem:[#allocation5 + $0x2e8] sm:$0xff]
    %v155 = vld [vmem:[#allocation5 + $0x2f0] sm:$0xff]
    %v156 = vld [vmem:[#allocation5 + $0x2f8] sm:$0xff]
    %v157 = vld [vmem:[#allocation5 + $0x300] sm:$0xff]
    %v158 = vld [vmem:[#allocation5 + $0x308] sm:$0xff]
    %v159 = vld [vmem:[#allocation5 + $0x310] sm:$0xff]
    %v160 = vld [vmem:[#allocation5 + $0x318] sm:$0xff]
    %v161 = vld [vmem:[#allocation5 + $0x320] sm:$0xff]
    %v162 = vld [vmem:[#allocation5 + $0x328] sm:$0xff]
    %v163 = vld [vmem:[#allocation5 + $0x330] sm:$0xff]
    %v164 = vld [vmem:[#allocation5 + $0x338] sm:$0xff]
    %v165 = vld [vmem:[#allocation5 + $0x340] sm:$0xff]
    %v166 = vld [vmem:[#allocation5 + $0x348] sm:$0xff]
    %v167 = vld [vmem:[#allocation5 + $0x350] sm:$0xff]
    %v168 = vld [vmem:[#allocation5 + $0x358] sm:$0xff]
    %v169 = vld [vmem:[#allocation5 + $0x360] sm:$0xff]
    %v170 = vld [vmem:[#allocation5 + $0x368] sm:$0xff]
    %v171 = vld [vmem:[#allocation5 + $0x370] sm:$0xff]
    %v172 = vld [vmem:[#allocation5 + $0x378] sm:$0xff]
    %v173 = vld [vmem:[#allocation5 + $0x380] sm:$0xff]
    %v174 = vld [vmem:[#allocation5 + $0x388] sm:$0xff]
    %v175 = vld [vmem:[#allocation5 + $0x390] sm:$0xff]
    %v176 = vld [vmem:[#allocation5 + $0x398] sm:$0xff]
    %v177 = vld [vmem:[#allocation5 + $0x3a0] sm:$0xff]
    %v178 = vld [vmem:[#allocation5 + $0x3a8] sm:$0xff]
    %v179 = vld [vmem:[#allocation5 + $0x3b0] sm:$0xff]
    %v180 = vld [vmem:[#allocation5 + $0x3b8] sm:$0xff]
    %v181 = vld [vmem:[#allocation5 + $0x3c0] sm:$0xff]
    %v182 = vld [vmem:[#allocation5 + $0x3c8] sm:$0xff]
    %v183 = vld [vmem:[#allocation5 + $0x3d0] sm:$0xff]
    %v184 = vld [vmem:[#allocation5 + $0x3d8] sm:$0xff]
    %v185 = vld [vmem:[#allocation5 + $0x3e0] sm:$0xff]
    %v186 = vld [vmem:[#allocation5 + $0x3e8] sm:$0xff]
    %v187 = vld [vmem:[#allocation5 + $0x3f0] sm:$0xff]
    %v188 = vld [vmem:[#allocation5 + $0x3f8] sm:$0xff]
    %v189 = vld [vmem:[#allocation5 + $0x400] sm:$0xff]
    %v190 = vld [vmem:[#allocation5 + $0x408] sm:$0xff]
    %v191 = vld [vmem:[#allocation5 + $0x410] sm:$0xff]
    %v192 = vld [vmem:[#allocation5 + $0x418] sm:$0xff]
    %v193 = vld [vmem:[#allocation5 + $0x420] sm:$0xff]
    %v194 = vld [vmem:[#allocation5 + $0x428] sm:$0xff]
    %v195 = vld [vmem:[#allocation5 + $0x430] sm:$0xff]
    %v196 = vld [vmem:[#allocation5 + $0x438] sm:$0xff]
    %v197 = vld [vmem:[#allocation5 + $0x440] sm:$0xff]
    %v198 = vld [vmem:[#allocation5 + $0x448] sm:$0xff]
    %v199 = vld [vmem:[#allocation5 + $0x450] sm:$0xff]
    %v200 = vld [vmem:[#allocation5 + $0x458] sm:$0xff]
    %v201 = vld [vmem:[#allocation5 + $0x460] sm:$0xff]
    %v202 = vld [vmem:[#allocation5 + $0x468] sm:$0xff]
    %v203 = vld [vmem:[#allocation5 + $0x470] sm:$0xff]
    %v204 = vld [vmem:[#allocation5 + $0x478] sm:$0xff]
    %v205 = vld [vmem:[#allocation5 + $0x480] sm:$0xff]
    %v206 = vld [vmem:[#allocation5 + $0x488] sm:$0xff]
    %v207 = vld [vmem:[#allocation5 + $0x490] sm:$0xff]
    %v208 = vld [vmem:[#allocation5 + $0x498] sm:$0xff]
    %v209 = vld [vmem:[#allocation5 + $0x4a0] sm:$0xff]
    %v210 = vld [vmem:[#allocation5 + $0x4a8] sm:$0xff]
    %v211 = vld [vmem:[#allocation5 + $0x4b0] sm:$0xff]
    %v212 = vld [vmem:[#allocation5 + $0x4b8] sm:$0xff]
    %v213 = vld [vmem:[#allocation5 + $0x4c0] sm:$0xff]
    %v214 = vld [vmem:[#allocation5 + $0x4c8] sm:$0xff]
    %v215 = vld [vmem:[#allocation5 + $0x4d0] sm:$0xff]
    %v216 = vld [vmem:[#allocation5 + $0x4d8] sm:$0xff]
    %v217 = vld [vmem:[#allocation5 + $0x4e0] sm:$0xff]
    %v218 = vld [vmem:[#allocation5 + $0x4e8] sm:$0xff]
    %v219 = vld [vmem:[#allocation5 + $0x4f0] sm:$0xff]
    %v220 = vld [vmem:[#allocation5 + $0x4f8] sm:$0xff]
    %v221 = vld [vmem:[#allocation5 + $0x500] sm:$0xff]
    %v222 = vld [vmem:[#allocation5 + $0x508] sm:$0xff]
    %v223 = vld [vmem:[#allocation5 + $0x510] sm:$0xff]
    %v224 = vld [vmem:[#allocation5 + $0x518] sm:$0xff]
    %v225 = vld [vmem:[#allocation5 + $0x520] sm:$0xff]
    %v226 = vld [vmem:[#allocation5 + $0x528] sm:$0xff]
    %v227 = vld [vmem:[#allocation5 + $0x530] sm:$0xff]
    %v228 = vld [vmem:[#allocation5 + $0x538] sm:$0xff]
    %v229 = vld [vmem:[#allocation5 + $0x540] sm:$0xff]
    %v230 = vld [vmem:[#allocation5 + $0x548] sm:$0xff]
    %v231 = vld [vmem:[#allocation5 + $0x550] sm:$0xff]
    %v232 = vld [vmem:[#allocation5 + $0x558] sm:$0xff]
    %v233 = vld [vmem:[#allocation5 + $0x560] sm:$0xff]
    %v234 = vld [vmem:[#allocation5 + $0x568] sm:$0xff]
    %v235 = vld [vmem:[#allocation5 + $0x570] sm:$0xff]
    %v236 = vld [vmem:[#allocation5 + $0x578] sm:$0xff]
    %v237 = vld [vmem:[#allocation5 + $0x580] sm:$0xff]
    %v238 = vld [vmem:[#allocation5 + $0x588] sm:$0xff]
    %v239 = vld [vmem:[#allocation5 + $0x590] sm:$0xff]
    %v240 = vld [vmem:[#allocation5 + $0x598] sm:$0xff]
    %v241 = vld [vmem:[#allocation5 + $0x5a0] sm:$0xff]
    %v242 = vld [vmem:[#allocation5 + $0x5a8] sm:$0xff]
    %v243 = vld [vmem:[#allocation5 + $0x5b0] sm:$0xff]
    %v244 = vld [vmem:[#allocation5 + $0x5b8] sm:$0xff]
    %v245 = vld [vmem:[#allocation5 + $0x5c0] sm:$0xff]
    %v246 = vld [vmem:[#allocation5 + $0x5c8] sm:$0xff]
    %v247 = vld [vmem:[#allocation5 + $0x5d0] sm:$0xff]
    %v248 = vld [vmem:[#allocation5 + $0x5d8] sm:$0xff]
    %v249 = vld [vmem:[#allocation5 + $0x5e0] sm:$0xff]
    %v250 = vld [vmem:[#allocation5 + $0x5e8] sm:$0xff]
    %v251 = vld [vmem:[#allocation5 + $0x5f0] sm:$0xff]
    %v252 = vld [vmem:[#allocation5 + $0x5f8] sm:$0xff]
    %v253 = vld [vmem:[%s2] sm:$0x3]
    %v255 = vlaneseq
    %v256 = vshrl.u32 %v255, 7
    %v257 = vsub.s32 0, %v256
    %v258 = vrot.slane %v253, %v257
    %v259 = vlaneseq
    %v260 = vshrl.u32 %v259, 7
    %v261 = vsub.s32 1, %v260
    %v262 = vrot.slane %v253, %v261
    %265 = vmatprep.subr.mxu0 %v62
    %266 = vmatpush1.msra.mxu0 %v61
    %267 = vmatprep.subr.mxu0 %v64
    %268 = vmatpush1.msra.mxu0 %v63
    %269 = vmatprep.subr.mxu0 %v66
    %270 = vmatpush1.msra.mxu0 %v65
    %271 = vmatprep.subr.mxu0 %v68
    %272 = vmatpush1.msra.mxu0 %v67
    %273 = vmatprep.subr.mxu0 %v70
    %274 = vmatpush1.msra.mxu0 %v69
    %275 = vmatprep.subr.mxu0 %v72
    %276 = vmatpush1.msra.mxu0 %v71
    %277 = vmatprep.subr.mxu0 %v74
    %278 = vmatpush1.msra.mxu0 %v73
    %279 = vmatprep.subr.mxu0 %v76
    %280 = vmatpush1.msra.mxu0 %v75
    %281 = vmatprep.subr.mxu0 %v78
    %282 = vmatpush1.msra.mxu0 %v77
    %283 = vmatprep.subr.mxu0 %v80
    %284 = vmatpush1.msra.mxu0 %v79
    %285 = vmatprep.subr.mxu0 %v82
    %286 = vmatpush1.msra.mxu0 %v81
    %287 = vmatprep.subr.mxu0 %v84
    %288 = vmatpush1.msra.mxu0 %v83
    %289 = vmatprep.subr.mxu0 %v86
    %290 = vmatpush1.msra.mxu0 %v85
    %291 = vmatprep.subr.mxu0 %v88
    %292 = vmatpush1.msra.mxu0 %v87
    %293 = vmatprep.subr.mxu0 %v90
    %294 = vmatpush1.msra.mxu0 %v89
    %295 = vmatprep.subr.mxu0 %v92
    %296 = vmatpush1.msra.mxu0 %v91
    %297 = vmatprep.subr.mxu0 %v94
    %298 = vmatpush1.msra.mxu0 %v93
    %299 = vmatprep.subr.mxu0 %v96
    %300 = vmatpush1.msra.mxu0 %v95
    %301 = vmatprep.subr.mxu0 %v98
    %302 = vmatpush1.msra.mxu0 %v97
    %303 = vmatprep.subr.mxu0 %v100
    %304 = vmatpush1.msra.mxu0 %v99
    %305 = vmatprep.subr.mxu0 %v102
    %306 = vmatpush1.msra.mxu0 %v101
    %307 = vmatprep.subr.mxu0 %v104
    %308 = vmatpush1.msra.mxu0 %v103
    %309 = vmatprep.subr.mxu0 %v106
    %310 = vmatpush1.msra.mxu0 %v105
    %311 = vmatprep.subr.mxu0 %v108
    %312 = vmatpush1.msra.mxu0 %v107
    %313 = vmatprep.subr.mxu0 %v110
    %314 = vmatpush1.msra.mxu0 %v109
    %315 = vmatprep.subr.mxu0 %v112
    %316 = vmatpush1.msra.mxu0 %v111
    %317 = vmatprep.subr.mxu0 %v114
    %318 = vmatpush1.msra.mxu0 %v113
    %319 = vmatprep.subr.mxu0 %v116
    %320 = vmatpush1.msra.mxu0 %v115
    %321 = vmatprep.subr.mxu0 %v118
    %322 = vmatpush1.msra.mxu0 %v117
    %323 = vmatprep.subr.mxu0 %v120
    %324 = vmatpush1.msra.mxu0 %v119
    %325 = vmatprep.subr.mxu0 %v122
    %326 = vmatpush1.msra.mxu0 %v121
    %327 = vmatprep.subr.mxu0 %v124
    %328 = vmatpush1.msra.mxu0 %v123
    %329 = vmatprep.mubr.f32.mxu0 %v44
    %330 = vmatmul.mubr.f32.gmra.mrb[0].mxu0 %v43
    %v331 = vpop.f32.mrb[0].mxu0
    %v332 = vadd.f32 %v258, %v331
    %v333 = vpop.f32.mrb[0].mxu0
    %v334 = vadd.f32 %v262, %v333
    %335 = vmatprep.mubr.f32.mxu0 %v50
    %336 = vmatmul.mubr.f32.gmra.mrb[0].mxu0 %v49
    %v337 = vpop.f32.mrb[0].mxu0
    %v338 = vadd.f32 %v258, %v337
    %v339 = vpop.f32.mrb[0].mxu0
    %v340 = vadd.f32 %v262, %v339
    %341 = vmatprep.mubr.f32.mxu0 %v56
    %342 = vmatmul.mubr.f32.gmra.mrb[0].mxu0 %v55
    %v343 = vpop.f32.mrb[0].mxu0
    %v344 = vadd.f32 %v258, %v343
    %v345 = vpop.f32.mrb[0].mxu0
    %v346 = vadd.f32 %v262, %v345
    %347 = vdwg.mxu0
    %348 = vmatprep.subr.mxu0 %v126
    %349 = vmatpush1.msra.mxu0 %v125
    %350 = vmatprep.subr.mxu0 %v128
    %351 = vmatpush1.msra.mxu0 %v127
    %352 = vmatprep.subr.mxu0 %v130
    %353 = vmatpush1.msra.mxu0 %v129
    %354 = vmatprep.subr.mxu0 %v132
    %355 = vmatpush1.msra.mxu0 %v131
    %356 = vmatprep.subr.mxu0 %v134
    %357 = vmatpush1.msra.mxu0 %v133
    %358 = vmatprep.subr.mxu0 %v136
    %359 = vmatpush1.msra.mxu0 %v135
    %360 = vmatprep.subr.mxu0 %v138
    %361 = vmatpush1.msra.mxu0 %v137
    %362 = vmatprep.subr.mxu0 %v140
    %363 = vmatpush1.msra.mxu0 %v139
    %364 = vmatprep.subr.mxu0 %v142
    %365 = vmatpush1.msra.mxu0 %v141
    %366 = vmatprep.subr.mxu0 %v144
    %367 = vmatpush1.msra.mxu0 %v143
    %368 = vmatprep.subr.mxu0 %v146
    %369 = vmatpush1.msra.mxu0 %v145
    %370 = vmatprep.subr.mxu0 %v148
    %371 = vmatpush1.msra.mxu0 %v147
    %372 = vmatprep.subr.mxu0 %v150
    %373 = vmatpush1.msra.mxu0 %v149
    %374 = vmatprep.subr.mxu0 %v152
    %375 = vmatpush1.msra.mxu0 %v151
    %376 = vmatprep.subr.mxu0 %v154
    %377 = vmatpush1.msra.mxu0 %v153
    %378 = vmatprep.subr.mxu0 %v156
    %379 = vmatpush1.msra.mxu0 %v155
    %380 = vmatprep.subr.mxu0 %v158
    %381 = vmatpush1.msra.mxu0 %v157
    %382 = vmatprep.subr.mxu0 %v160
    %383 = vmatpush1.msra.mxu0 %v159
    %384 = vmatprep.subr.mxu0 %v162
    %385 = vmatpush1.msra.mxu0 %v161
    %386 = vmatprep.subr.mxu0 %v164
    %387 = vmatpush1.msra.mxu0 %v163
    %388 = vmatprep.subr.mxu0 %v166
    %389 = vmatpush1.msra.mxu0 %v165
    %390 = vmatprep.subr.mxu0 %v168
    %391 = vmatpush1.msra.mxu0 %v167
    %392 = vmatprep.subr.mxu0 %v170
    %393 = vmatpush1.msra.mxu0 %v169
    %394 = vmatprep.subr.mxu0 %v172
    %395 = vmatpush1.msra.mxu0 %v171
    %396 = vmatprep.subr.mxu0 %v174
    %397 = vmatpush1.msra.mxu0 %v173
    %398 = vmatprep.subr.mxu0 %v176
    %399 = vmatpush1.msra.mxu0 %v175
    %400 = vmatprep.subr.mxu0 %v178
    %401 = vmatpush1.msra.mxu0 %v177
    %402 = vmatprep.subr.mxu0 %v180
    %403 = vmatpush1.msra.mxu0 %v179
    %404 = vmatprep.subr.mxu0 %v182
    %405 = vmatpush1.msra.mxu0 %v181
    %406 = vmatprep.subr.mxu0 %v184
    %407 = vmatpush1.msra.mxu0 %v183
    %408 = vmatprep.subr.mxu0 %v186
    %409 = vmatpush1.msra.mxu0 %v185
    %410 = vmatprep.subr.mxu0 %v188
    %411 = vmatpush1.msra.mxu0 %v187
    %412 = vmatprep.mubr.f32.mxu0 %v46
    %413 = vmatmul.mubr.f32.gmra.mrb[0].mxu0 %v45
    %v414 = vpop.f32.mrb[0].mxu0
    %v415 = vadd.f32 %v332, %v414
    %v416 = vpop.f32.mrb[0].mxu0
    %v417 = vadd.f32 %v334, %v416
    %418 = vmatprep.mubr.f32.mxu0 %v52
    %419 = vmatmul.mubr.f32.gmra.mrb[0].mxu0 %v51
    %v420 = vpop.f32.mrb[0].mxu0
    %v421 = vadd.f32 %v338, %v420
    %v422 = vpop.f32.mrb[0].mxu0
    %v423 = vadd.f32 %v340, %v422
    %424 = vmatprep.mubr.f32.mxu0 %v58
    %425 = vmatmul.mubr.f32.gmra.mrb[0].mxu0 %v57
    %v426 = vpop.f32.mrb[0].mxu0
    %v427 = vadd.f32 %v344, %v426
    %v428 = vpop.f32.mrb[0].mxu0
    %v429 = vadd.f32 %v346, %v428
    %430 = vdwg.mxu0
    %431 = vmatprep.subr.mxu0 %v190
    %432 = vmatpush1.msra.mxu0 %v189
    %433 = vmatprep.subr.mxu0 %v192
    %434 = vmatpush1.msra.mxu0 %v191
    %435 = vmatprep.subr.mxu0 %v194
    %436 = vmatpush1.msra.mxu0 %v193
    %437 = vmatprep.subr.mxu0 %v196
    %438 = vmatpush1.msra.mxu0 %v195
    %439 = vmatprep.subr.mxu0 %v198
    %440 = vmatpush1.msra.mxu0 %v197
    %441 = vmatprep.subr.mxu0 %v200
    %442 = vmatpush1.msra.mxu0 %v199
    %443 = vmatprep.subr.mxu0 %v202
    %444 = vmatpush1.msra.mxu0 %v201
    %445 = vmatprep.subr.mxu0 %v204
    %446 = vmatpush1.msra.mxu0 %v203
    %447 = vmatprep.subr.mxu0 %v206
    %448 = vmatpush1.msra.mxu0 %v205
    %449 = vmatprep.subr.mxu0 %v208
    %450 = vmatpush1.msra.mxu0 %v207
    %451 = vmatprep.subr.mxu0 %v210
    %452 = vmatpush1.msra.mxu0 %v209
    %453 = vmatprep.subr.mxu0 %v212
    %454 = vmatpush1.msra.mxu0 %v211
    %455 = vmatprep.subr.mxu0 %v214
    %456 = vmatpush1.msra.mxu0 %v213
    %457 = vmatprep.subr.mxu0 %v216
    %458 = vmatpush1.msra.mxu0 %v215
    %459 = vmatprep.subr.mxu0 %v218
    %460 = vmatpush1.msra.mxu0 %v217
    %461 = vmatprep.subr.mxu0 %v220
    %462 = vmatpush1.msra.mxu0 %v219
    %463 = vmatprep.subr.mxu0 %v222
    %464 = vmatpush1.msra.mxu0 %v221
    %465 = vmatprep.subr.mxu0 %v224
    %466 = vmatpush1.msra.mxu0 %v223
    %467 = vmatprep.subr.mxu0 %v226
    %468 = vmatpush1.msra.mxu0 %v225
    %469 = vmatprep.subr.mxu0 %v228
    %470 = vmatpush1.msra.mxu0 %v227
    %471 = vmatprep.subr.mxu0 %v230
    %472 = vmatpush1.msra.mxu0 %v229
    %473 = vmatprep.subr.mxu0 %v232
    %474 = vmatpush1.msra.mxu0 %v231
    %475 = vmatprep.subr.mxu0 %v234
    %476 = vmatpush1.msra.mxu0 %v233
    %477 = vmatprep.subr.mxu0 %v236
    %478 = vmatpush1.msra.mxu0 %v235
    %479 = vmatprep.subr.mxu0 %v238
    %480 = vmatpush1.msra.mxu0 %v237
    %481 = vmatprep.subr.mxu0 %v240
    %482 = vmatpush1.msra.mxu0 %v239
    %483 = vmatprep.subr.mxu0 %v242
    %484 = vmatpush1.msra.mxu0 %v241
    %485 = vmatprep.subr.mxu0 %v244
    %486 = vmatpush1.msra.mxu0 %v243
    %487 = vmatprep.subr.mxu0 %v246
    %488 = vmatpush1.msra.mxu0 %v245
    %489 = vmatprep.subr.mxu0 %v248
    %490 = vmatpush1.msra.mxu0 %v247
    %491 = vmatprep.subr.mxu0 %v250
    %492 = vmatpush1.msra.mxu0 %v249
    %493 = vmatprep.subr.mxu0 %v252
    %494 = vmatpush1.msra.mxu0 %v251
    %495 = vmatprep.mubr.f32.mxu0 %v48
    %496 = vmatmul.mubr.f32.gmra.mrb[0].mxu0 %v47
    %v497 = vpop.f32.mrb[0].mxu0
    %v498 = vadd.f32 %v415, %v497
    %v499 = vpop.f32.mrb[0].mxu0
    %v500 = vadd.f32 %v417, %v499
    %501 = vmatprep.mubr.f32.mxu0 %v54
    %502 = vmatmul.mubr.f32.gmra.mrb[0].mxu0 %v53
    %v503 = vpop.f32.mrb[0].mxu0
    %v504 = vadd.f32 %v421, %v503
    %v505 = vpop.f32.mrb[0].mxu0
    %v506 = vadd.f32 %v423, %v505
    %507 = vmatprep.mubr.f32.mxu0 %v60
    %508 = vmatmul.mubr.f32.gmra.mrb[0].mxu0 %v59
    %v509 = vpop.f32.mrb[0].mxu0
    %v510 = vadd.f32 %v427, %v509
    %v511 = vpop.f32.mrb[0].mxu0
    %v512 = vadd.f32 %v429, %v511
    %513 = vdwg.mxu0
    %v514 = vmul.f32 %v498, %v498
    %v515 = vmul.f32 %v500, %v500
    %v516 = vmul.f32 %v504, %v504
    %v517 = vmul.f32 %v506, %v506
    %v518 = vmul.f32 %v510, %v510
    %v519 = vmul.f32 %v512, %v512
    %v520 = vadd.f32 %v514, %v515
    %521 = vadd.xlane.f32.xlu0 %v520
    %v522 = vpop.xlane.xlu0 %521
    %v523 = vadd.f32 %v516, %v517
    %524 = vadd.xlane.f32.xlu0 %v523
    %v525 = vpop.xlane.xlu0 %524
    %v526 = vadd.f32 %v518, %v519
    %527 = vadd.xlane.f32.xlu0 %v526
    %v528 = vpop.xlane.xlu0 %527
    %v529 = vmax.f32 %v522, 1e-30
    %v530 = vmax.f32 %v525, 1e-30
    %v531 = vmax.f32 %v528, 1e-30
    %v532 = vrsqrt.pop %v529
    %v533 = vrsqrt.pop %v530
    %v534 = vrsqrt.pop %v531
    %v535 = vmul.f32 %v498, %v532
    %v536 = vmul.f32 %v500, %v532
    %v537 = vmul.f32 %v504, %v533
    %v538 = vmul.f32 %v506, %v533
    %v539 = vmul.f32 %v510, %v534
    %v540 = vmul.f32 %v512, %v534
    %541 = vst [vmem:[#allocation7] sm:$0xff] %v535
    %542 = vst [vmem:[#allocation7 + $0x8] sm:$0xff] %v536
    %543 = vst [vmem:[#allocation7 + $0x10] sm:$0xff] %v537
    %544 = vst [vmem:[#allocation7 + $0x18] sm:$0xff] %v538
    %545 = vst [vmem:[#allocation7 + $0x20] sm:$0xff] %v539
    %546 = vst [vmem:[#allocation7 + $0x28] sm:$0xff] %v540
    // Predicated region
    $region22: #{tpu_custom_call.1} parent=1 // pred_check
      _
    $region23: #{tpu_custom_call.1} parent=1 // pred_check_branch
      %548 = sbr.rel (0) target = $region25
    $region24: #{tpu_custom_call.1} parent=1 // pred_region
      %s550 = ssub.s32 768, 768
      %551 = vsyncadd [#allocation4], %s550
      %s552 = sshll.u32 [#allocation7], 4
      %s553 = int_to_ptr.vmem [resolvable:$true] %s552
      %558 = dma.vmem_to_hbm [thread:$0]  %s553, 768, %s3, [#allocation4], 256, 256, 16
    $region25: #{tpu_custom_call.1} parent=1 // pred_fallthru
      _
    // Predicated region
    $region26: #{tpu_custom_call.1} parent=1 // pred_check
      _
    $region27: #{tpu_custom_call.1} parent=1 // pred_check_branch
      %560 = sbr.rel (0) target = $region29
    $region28: #{tpu_custom_call.1} parent=1 // pred_region
      %561 = dma.done [#allocation4], 768
    $region29: #{tpu_custom_call.1} parent=1 // pred_fallthru
      _
    %562 = vsyncpa [#allocation3], 1
    %563 = vsyncpa [#allocation6], 1
    %564 = vsyncpa [#allocation4], 1

</llo_original>
